<compile_context>
chip_gen: v5e
topology: v5e:2x2
jax: 0.10.0
libtpu: 0.0.40
codegen_flags: <defaults>
</compile_context>

<pallas_src>
import jax
import jax.numpy as jnp
from jax import lax
from jax.experimental import pallas as pl
from jax.experimental.pallas import tpu as pltpu


def _round_up(x: int, m: int) -> int:
    return ((x + m - 1) // m) * m


def _masked_sq_sum_kernel(thresh_ref, pred_ref, true_ref, out_ref, acc_ref):
    """Accumulate the masked sum of squared differences for one row-block."""
    i = pl.program_id(1)                      # reduction axis (row blocks)

    @pl.when(i == 0)
    def _init():
        acc_ref[...] = jnp.zeros_like(acc_ref)

    tb, w = pred_ref.shape

    # Upcast per tile (inputs may be bf16); all accumulation is f32.
    diff = pred_ref[...].astype(jnp.float32) - true_ref[...].astype(jnp.float32)

    # Lane j of a row belongs to frame j // 16; frame f of row b is valid iff
    # f < lengths[b] - 1, i.e. lane j is valid iff j < (lengths[b]-1)*16.
    # One broadcast compare against the precomputed per-row threshold; use
    # jnp.where (not mask-multiply) so non-finite garbage in masked frames /
    # stale tail rows cannot poison the sum.
    lane_idx = lax.broadcasted_iota(jnp.int32, (tb, w), 1)
    masked = jnp.where(lane_idx < thresh_ref[...], diff, 0.0)
    sq = masked * masked

    # Deferred reduction: fold sublane groups with pure VPU adds each step;
    # the single cross-lane/sublane (XLU) reduce happens only at finalize.
    acc_ref[...] += sq.reshape(tb // 8, 8, w).sum(axis=0)

    @pl.when(i == pl.num_programs(1) - 1)
    def _finalize():
        out_ref[...] = jnp.sum(acc_ref[...], keepdims=True).reshape(1, 1, 1)


def masked_mse_loss(y_pred: jax.Array, y_true: jax.Array, lengths: jax.Array,
                    *, block_rows: int | None = None,
                    num_partials: int = 2) -> jax.Array:
    """
    Args:
        y_pred:  (B, N-1, 4, 4)
        y_true:  (B, N-1, 4, 4)
        lengths: (B,) number of valid frames per batch element
    Returns:
        scalar float32 loss (MSE over valid frames; NaN if no frame is valid,
        matching torch.mean over an empty selection).
    """
    B, nm1 = y_pred.shape[0], y_pred.shape[1]
    w = nm1 * 16

    # Lane-dense 2-D views; no wrapper-side copies of the big tensors.
    pred_flat = y_pred.reshape(B, w)
    true_flat = y_true.reshape(B, w)

    lens = lengths.astype(jnp.int32)
    n_valid_frames = jnp.clip(lens - 1, 0, nm1)                     # (B,)
    count = jnp.sum(n_valid_frames).astype(jnp.float32) * 16.0      # denominator
    thresh = (n_valid_frames * 16).reshape(B, 1)                    # per-row lane threshold

    itemsize = pred_flat.dtype.itemsize
    sub = max(8, 32 // itemsize)              # sublane quantum for the input dtype

    # Tile sizing: budget ~12 MiB of VMEM per buffer set (2 data tiles plus the
    # lane-padded (tb, 1) threshold column at ~512 B/row); double-buffered by
    # the pipeline => ~24 MiB, under the explicit 32 MiB limit on every
    # generation (v5e scoped default is only 16 MiB, v7x physical is 64 MiB).
    if block_rows is None:
        budget = 12 * 1024 * 1024
        row_cost = 2 * w * itemsize + 512
        row_cap = max(sub, (budget // row_cost) // sub * sub)
        tb = min(_round_up(B, sub), row_cap)
    else:
        tb = _round_up(block_rows, sub)
    # TODO(synk): for very wide rows (w*itemsize >~ 1 MiB) add a second lane
    # grid axis so the tile stays bounded instead of bottoming out at tb=sub.

    total_blocks = pl.cdiv(B, tb)
    nparts = num_partials if total_blocks >= num_partials else 1
    bpc = pl.cdiv(total_blocks, nparts)       # row blocks per partial / core

    # Pad only the tiny threshold column so every (partial, block) grid point
    # is covered; padded rows get threshold 0 => fully masked (this also
    # neutralizes stale VMEM rows of ragged tail blocks and dead iterations).
    padded_rows = nparts * bpc * tb
    if padded_rows != B:
        thresh = jnp.pad(thresh, ((0, padded_rows - B), (0, 0)))

    def data_map(c, i):
        # Clamp so the DMA window of dead trailing iterations stays in bounds;
        # their contribution is zeroed by the zero-padded thresholds.
        return (jnp.minimum(c * bpc + i, total_blocks - 1), 0)

    partials = pl.pallas_call(
        _masked_sq_sum_kernel,
        out_shape=jax.ShapeDtypeStruct((nparts, 1, 1), jnp.float32),
        grid=(nparts, bpc),
        in_specs=[
            pl.BlockSpec((tb, 1), lambda c, i: (c * bpc + i, 0)),   # thresholds (padded)
            pl.BlockSpec((tb, w), data_map),                        # y_pred row-block
            pl.BlockSpec((tb, w), data_map),                        # y_true row-block
        ],
        out_specs=pl.BlockSpec((1, 1, 1), lambda c, i: (c, 0, 0)),
        scratch_shapes=[pltpu.VMEM((8, w), jnp.float32)],           # deferred-reduce acc
        compiler_params=pltpu.CompilerParams(
            dimension_semantics=("parallel", "arbitrary"),
            vmem_limit_bytes=32 * 1024 * 1024,
        ),
    )(thresh, pred_flat, true_flat)

    # count == 0 -> 0/0 = NaN, matching torch.mean over an empty selection.
    return jnp.sum(partials) / count


def _reference_loss(y_pred, y_true, lengths):
    B, nm1 = y_pred.shape[:2]
    frame_idx = jnp.arange(nm1)[None, :]
    valid = frame_idx < (lengths[:, None] - 1)                 # (B, N-1)
    sq = (y_pred.astype(jnp.float32) - y_true.astype(jnp.float32)) ** 2
    masked = jnp.where(valid[:, :, None, None], sq, 0.0)
    return jnp.sum(masked) / (jnp.sum(valid).astype(jnp.float32) * 16.0)


if __name__ == "__main__":
    k1, k2, k3, k4, k5, k6, k7 = jax.random.split(jax.random.PRNGKey(0), 7)

    # 1) Small shapes from the module: B=2, max_n-1=8 frames of 4x4 transforms.
    B, nm1 = 2, 8
    y_pred = jax.random.normal(k1, (B, nm1, 4, 4), dtype=jnp.float32)
    y_true = jax.random.normal(k2, (B, nm1, 4, 4), dtype=jnp.float32)
    lengths = jnp.array([6, 3], dtype=jnp.int32)   # valid frames: 5 and 2
    loss = jax.block_until_ready(masked_mse_loss(y_pred, y_true, lengths))
    ref = _reference_loss(y_pred, y_true, lengths)
    assert jnp.allclose(loss, ref, rtol=1e-5, atol=1e-6), (loss, ref)

    # 2) Multi-block / two-partial / dead-iteration / ragged-tail path, with
    #    lengths that are 0, 1 and > N-1.
    B2 = 20
    y_pred2 = jax.random.normal(k3, (B2, nm1, 4, 4), dtype=jnp.float32)
    y_true2 = jax.random.normal(k4, (B2, nm1, 4, 4), dtype=jnp.float32)
    lengths2 = jax.random.randint(k5, (B2,), 0, nm1 + 2, dtype=jnp.int32)
    lengths2 = lengths2.at[0].set(jnp.int32(nm1))   # guarantee >= 1 valid frame
    loss2 = jax.block_until_ready(
        masked_mse_loss(y_pred2, y_true2, lengths2, block_rows=8))
    ref2 = _reference_loss(y_pred2, y_true2, lengths2)
    assert jnp.allclose(loss2, ref2, rtol=1e-5, atol=1e-6), (loss2, ref2)

    # 3) bf16 inputs (per-tile f32 upcast, sublane quantum 16), multi-block.
    B3 = 40
    y_pred3 = jax.random.normal(k6, (B3, nm1, 4, 4), jnp.float32).astype(jnp.bfloat16)
    y_true3 = jax.random.normal(k7, (B3, nm1, 4, 4), jnp.float32).astype(jnp.bfloat16)
    lengths3 = jnp.arange(B3, dtype=jnp.int32) % (nm1 + 2)
    loss3 = jax.block_until_ready(
        masked_mse_loss(y_pred3, y_true3, lengths3, block_rows=16))
    ref3 = _reference_loss(y_pred3, y_true3, lengths3)
    assert jnp.allclose(loss3, ref3, rtol=1e-5, atol=1e-6), (loss3, ref3)

    print("KERNEL_OK")
</pallas_src>

<mosaic_0001>
module attributes {stable_mosaic.version = 11 : i64} {
  func.func @_masked_sq_sum_kernel(%arg0: i32, %arg1: i32, %arg2: memref<8x1xi32, #tpu.memory_space<vmem>>, %arg3: memref<8x128xf32, #tpu.memory_space<vmem>>, %arg4: memref<8x128xf32, #tpu.memory_space<vmem>>, %arg5: memref<1x1x1xf32, #tpu.memory_space<vmem>>, %arg6: memref<8x128xf32, #tpu.memory_space<vmem>>) attributes {dimension_semantics = [#tpu.dimension_semantics<parallel>, #tpu.dimension_semantics<arbitrary>], iteration_bounds = array<i64: 1, 1>, scalar_prefetch = 0 : i64, scratch_operands = 1 : i64, tpu.core_type = #tpu.core_type<tc>, window_params = [{transform_indices = @transform_0, window_bounds = array<i64: 8, 1>}, {transform_indices = @transform_1, window_bounds = array<i64: 8, 128>}, {transform_indices = @transform_2, window_bounds = array<i64: 8, 128>}, {transform_indices = @transform_3, window_bounds = array<i64: 1, 1, 1>}]} {
    %c0_i32 = arith.constant 0 : i32
    %0 = arith.cmpi eq, %arg1, %c0_i32 : i32
    %1 = arith.extui %0 : i1 to i32
    %c0_i32_0 = arith.constant 0 : i32
    %2 = arith.cmpi ne, %1, %c0_i32_0 : i32
    scf.if %2 {
      %cst_13 = arith.constant 0.000000e+00 : f32
      %21 = vector.broadcast %cst_13 : f32 to vector<8x128xf32>
      %c0_14 = arith.constant 0 : index
      %c0_15 = arith.constant 0 : index
      %22 = vector.load %arg6[%c0_14, %c0_15] : memref<8x128xf32, #tpu.memory_space<vmem>>, vector<8x128xf32>
      tpu.vector_store %arg6[%c0_14, %c0_15], %21 {strides = array<i32>} : memref<8x128xf32, #tpu.memory_space<vmem>>, vector<8x128xf32>,
    } else {
    }
    %c0 = arith.constant 0 : index
    %c0_1 = arith.constant 0 : index
    %3 = vector.load %arg3[%c0, %c0_1] : memref<8x128xf32, #tpu.memory_space<vmem>>, vector<8x128xf32>
    %c0_2 = arith.constant 0 : index
    %c0_3 = arith.constant 0 : index
    %4 = vector.load %arg4[%c0_2, %c0_3] : memref<8x128xf32, #tpu.memory_space<vmem>>, vector<8x128xf32>
    %5 = arith.subf %3, %4 : vector<8x128xf32>
    %6 = tpu.iota {dimensions = array<i32: 1>} : vector<8x128xi32>
    %c0_4 = arith.constant 0 : index
    %c0_5 = arith.constant 0 : index
    %7 = vector.load %arg2[%c0_4, %c0_5] : memref<8x1xi32, #tpu.memory_space<vmem>>, vector<8x1xi32>
    %8 = vector.broadcast %7 : vector<8x1xi32> to vector<8x128xi32>
    %9 = arith.cmpi slt, %6, %8 : vector<8x128xi32>
    %cst = arith.constant 0.000000e+00 : f32
    %10 = vector.broadcast %cst : f32 to vector<8x128xf32>
    %11 = arith.select %9, %5, %10 : vector<8x128xi1>, vector<8x128xf32>
    %12 = arith.mulf %11, %11 : vector<8x128xf32>
    %c0_6 = arith.constant 0 : index
    %c0_7 = arith.constant 0 : index
    %13 = vector.load %arg6[%c0_6, %c0_7] : memref<8x128xf32, #tpu.memory_space<vmem>>, vector<8x128xf32>
    %14 = vector.shape_cast %12 : vector<8x128xf32> to vector<1x8x128xf32>
    %cst_8 = arith.constant dense<0.000000e+00> : vector<8x128xf32>
    %15 = vector.multi_reduction <add>, %14, %cst_8 [0] : vector<1x8x128xf32> to vector<8x128xf32>
    %16 = arith.addf %13, %15 : vector<8x128xf32>
    %c0_9 = arith.constant 0 : index
    %c0_10 = arith.constant 0 : index
    %17 = vector.load %arg6[%c0_9, %c0_10] : memref<8x128xf32, #tpu.memory_space<vmem>>, vector<8x128xf32>
    tpu.vector_store %arg6[%c0_9, %c0_10], %16 {strides = array<i32>} : memref<8x128xf32, #tpu.memory_space<vmem>>, vector<8x128xf32>,
    %c0_i32_11 = arith.constant 0 : i32
    %18 = arith.cmpi eq, %arg1, %c0_i32_11 : i32
    %19 = arith.extui %18 : i1 to i32
    %c0_i32_12 = arith.constant 0 : i32
    %20 = arith.cmpi ne, %19, %c0_i32_12 : i32
    scf.if %20 {
      %c0_13 = arith.constant 0 : index
      %c0_14 = arith.constant 0 : index
      %21 = vector.load %arg6[%c0_13, %c0_14] : memref<8x128xf32, #tpu.memory_space<vmem>>, vector<8x128xf32>
      %22 = vector.shape_cast %21 : vector<8x128xf32> to vector<1x8x128xf32>
      %cst_15 = arith.constant dense<0.000000e+00> : vector<1xf32>
      %23 = vector.multi_reduction <add>, %22, %cst_15 [1, 2] : vector<1x8x128xf32> to vector<1xf32>
      %24 = vector.shape_cast %23 : vector<1xf32> to vector<1x1x1xf32>
      %25 = vector.extract %24[0, 0, 0] : f32 from vector<1x1x1xf32>
      %26 = vector.broadcast %25 : f32 to vector<1x1xf32>
      %27 = vector.shape_cast %26 : vector<1x1xf32> to vector<1x1x1xf32>
      %c0_16 = arith.constant 0 : index
      %c0_17 = arith.constant 0 : index
      %c0_18 = arith.constant 0 : index
      %28 = vector.load %arg5[%c0_16, %c0_17, %c0_18] : memref<1x1x1xf32, #tpu.memory_space<vmem>>, vector<1x1x1xf32>
      tpu.vector_store %arg5[%c0_16, %c0_17, %c0_18], %27 {strides = array<i32>} : memref<1x1x1xf32, #tpu.memory_space<vmem>>, vector<1x1x1xf32>,
    } else {
    }
    return
  }
  func.func @transform_0(%arg0: i32, %arg1: i32) -> (i32, i32) {
    %c1_i32 = arith.constant 1 : i32
    %0 = arith.muli %arg0, %c1_i32 : i32
    %1 = arith.addi %0, %arg1 : i32
    %c0_i32 = arith.constant 0 : i32
    %c0_i32_0 = arith.constant 0 : i32
    return %1, %c0_i32 : i32, i32
  }
  func.func @transform_1(%arg0: i32, %arg1: i32) -> (i32, i32) {
    %c1_i32 = arith.constant 1 : i32
    %0 = arith.muli %arg0, %c1_i32 : i32
    %1 = arith.addi %0, %arg1 : i32
    %c0_i32 = arith.constant 0 : i32
    %2 = arith.minsi %1, %c0_i32 : i32
    %c0_i32_0 = arith.constant 0 : i32
    %c0_i32_1 = arith.constant 0 : i32
    return %2, %c0_i32_0 : i32, i32
  }
  func.func @transform_2(%arg0: i32, %arg1: i32) -> (i32, i32) {
    %c1_i32 = arith.constant 1 : i32
    %0 = arith.muli %arg0, %c1_i32 : i32
    %1 = arith.addi %0, %arg1 : i32
    %c0_i32 = arith.constant 0 : i32
    %2 = arith.minsi %1, %c0_i32 : i32
    %c0_i32_0 = arith.constant 0 : i32
    %c0_i32_1 = arith.constant 0 : i32
    return %2, %c0_i32_0 : i32, i32
  }
  func.func @transform_3(%arg0: i32, %arg1: i32) -> (i32, i32, i32) {
    %c0_i32 = arith.constant 0 : i32
    %c0_i32_0 = arith.constant 0 : i32
    %c0_i32_1 = arith.constant 0 : i32
    return %arg0, %c0_i32, %c0_i32_0 : i32, i32, i32
  }
}

</mosaic_0001>

<llo_original>
// kernel: tpu_custom_call.1
$region0: #{tpu_custom_call.1}
  #allocation0 [shape = 'u32[]', space=smem, size = 0x4, offset = 0x4, fixed_abs, tag = 'smem constant byte address 0x4 - core index']
  #allocation1 [shape = 'u32[72,128]{1,0:T(1,128)}', space=vmem, size = 0x9000, scoped, tag = 'internal scratch']
  #allocation2 [shape = 'f32[8,128]{1,0:T(8,128)}', space=vmem, size = 0x1000, scoped, tag = 'scratch operand']
  %s0 = inlined_call_operand.vmem [shape: s32[8,1], index: 0, kind: input, shape index: {}]
  %s1 = inlined_call_operand.vmem [shape: f32[2,128], index: 1, kind: input, shape index: {}]
  %s2 = inlined_call_operand.vmem [shape: f32[2,128], index: 2, kind: input, shape index: {}]
  %s3 = inlined_call_operand.hbm [shape: f32[1,1,1], index: 3, kind: output, shape index: {}]
  %s4 = sld [smem:[#allocation0]]
  $region30: #{tpu_custom_call.1} parent=0
    _
  %s6 = ssub.s32 1, %s4
  %s7 = scalar_select 0, %s6, %s4
  $region1: #{tpu_custom_call.1} parent=0
    #allocation3 [shape = 'u8[512]{0}', space=vmem, size = 0x400, scoped, tag = 'output window, operand 0, single buffered']
    #allocation4 [shape = 's32[1]{0}', space=sflag, size = 0x4, scoped, tag = 'scoped memory for tpu_custom_call.1']
    %8 = vsyncpa [#allocation4], 0
    // Predicated region
    $region2: #{tpu_custom_call.1} parent=1 // pred_check
      _
    $region3: #{tpu_custom_call.1} parent=1 // pred_check_branch
      %10 = sbr.rel (0) target = $region5
    $region4: #{tpu_custom_call.1} parent=1 // pred_region
      %s11 = sadd.s32 0, 0
      %p12 = scmp.lt.s32.totalorder %s11, 0
      %s13 = scalar_select %p12, %s11, 0
      %s14 = smul.addr %s13, 8
      %s15 = scalar_lea.vmem %s0, %s14
      %s16 = sadd.s32 0, 0
    $region5: #{tpu_custom_call.1} parent=1 // pred_fallthru
      _
    // Predicated region
    $region6: #{tpu_custom_call.1} parent=1 // pred_check
      _
    $region7: #{tpu_custom_call.1} parent=1 // pred_check_branch
      %18 = sbr.rel (0) target = $region9
    $region8: #{tpu_custom_call.1} parent=1 // pred_region
      %s19 = sadd.s32 0, 0
      %p20 = scmp.lt.s32.totalorder %s19, 0
      %s21 = scalar_select %p20, %s19, 0
      %s22 = smul.u32 4, %s21
      %s23 = ssub.s32 1, %s22
      %s24 = smul.u32 2, %s23
      %p25 = scmp.lt.s32.totalorder %s22, 0
      %s26 = scalar_select %p25, %s22, 0
      %s27 = smul.addr %s26, 2
      %s28 = scalar_lea.vmem %s1, %s27
      %s29 = sadd.s32 0, 0
      %p30 = scmp.lt.s32.totalorder %s29, 0
      %s31 = scalar_select %p30, %s29, 0
      %s32 = smul.u32 4, %s31
      %s33 = ssub.s32 1, %s32
      %s34 = smul.u32 2, %s33
    $region9: #{tpu_custom_call.1} parent=1 // pred_fallthru
      _
    // Predicated region
    $region10: #{tpu_custom_call.1} parent=1 // pred_check
      _
    $region11: #{tpu_custom_call.1} parent=1 // pred_check_branch
      %36 = sbr.rel (0) target = $region13
    $region12: #{tpu_custom_call.1} parent=1 // pred_region
      %s37 = sadd.s32 0, 0
      %p38 = scmp.lt.s32.totalorder %s37, 0
      %s39 = scalar_select %p38, %s37, 0
      %s40 = smul.u32 4, %s39
      %s41 = ssub.s32 1, %s40
      %s42 = smul.u32 2, %s41
      %p43 = scmp.lt.s32.totalorder %s40, 0
      %s44 = scalar_select %p43, %s40, 0
      %s45 = smul.addr %s44, 2
      %s46 = scalar_lea.vmem %s2, %s45
      %s47 = sadd.s32 0, 0
      %p48 = scmp.lt.s32.totalorder %s47, 0
      %s49 = scalar_select %p48, %s47, 0
      %s50 = smul.u32 4, %s49
      %s51 = ssub.s32 1, %s50
      %s52 = smul.u32 2, %s51
    $region13: #{tpu_custom_call.1} parent=1 // pred_fallthru
      _
    %s53 = sadd.s32 0, 0
    %p54 = scmp.lt.s32.totalorder %s53, 0
    %s55 = scalar_select %p54, %s53, 0
    %s56 = smul.addr %s55, 8
    %s57 = scalar_lea.vmem %s0, %s56
    %s58 = sadd.s32 0, 0
    %p59 = scmp.lt.s32.totalorder %s58, 0
    %s60 = scalar_select %p59, %s58, 0
    %s61 = smul.u32 4, %s60
    %s62 = ssub.s32 1, %s61
    %s63 = smul.u32 2, %s62
    %p64 = scmp.lt.s32.totalorder %s61, 0
    %s65 = scalar_select %p64, %s61, 0
    %s66 = smul.addr %s65, 2
    %s67 = scalar_lea.vmem %s1, %s66
    %s68 = sadd.s32 0, 0
    %p69 = scmp.lt.s32.totalorder %s68, 0
    %s70 = scalar_select %p69, %s68, 0
    %s71 = smul.u32 4, %s70
    %s72 = ssub.s32 1, %s71
    %s73 = smul.u32 2, %s72
    %p74 = scmp.lt.s32.totalorder %s71, 0
    %s75 = scalar_select %p74, %s71, 0
    %s76 = smul.addr %s75, 2
    %s77 = scalar_lea.vmem %s2, %s76
    %s78 = sadd.s32 0, 0
    %p79 = scmp.lt.s32.totalorder %s78, 0
    %s80 = scalar_select %p79, %s78, 0
    %s81 = smul.addr %s80, 8
    %s82 = scalar_lea.vmem %s0, %s81
    %s83 = sadd.s32 0, 0
    %s84 = sadd.s32 0, 0
    %p85 = scmp.lt.s32.totalorder %s84, 0
    %s86 = scalar_select %p85, %s84, 0
    %s87 = smul.u32 4, %s86
    %s88 = ssub.s32 1, %s87
    %s89 = smul.u32 2, %s88
    %p90 = scmp.lt.s32.totalorder %s87, 0
    %s91 = scalar_select %p90, %s87, 0
    %s92 = smul.addr %s91, 2
    %s93 = scalar_lea.vmem %s1, %s92
    %s94 = sadd.s32 0, 0
    %p95 = scmp.lt.s32.totalorder %s94, 0
    %s96 = scalar_select %p95, %s94, 0
    %s97 = smul.u32 4, %s96
    %s98 = ssub.s32 1, %s97
    %s99 = smul.u32 2, %s98
    %s100 = sadd.s32 0, 0
    %p101 = scmp.lt.s32.totalorder %s100, 0
    %s102 = scalar_select %p101, %s100, 0
    %s103 = smul.u32 4, %s102
    %s104 = ssub.s32 1, %s103
    %s105 = smul.u32 2, %s104
    %p106 = scmp.lt.s32.totalorder %s103, 0
    %s107 = scalar_select %p106, %s103, 0
    %s108 = smul.addr %s107, 2
    %s109 = scalar_lea.vmem %s2, %s108
    %s110 = sadd.s32 0, 0
    %p111 = scmp.lt.s32.totalorder %s110, 0
    %s112 = scalar_select %p111, %s110, 0
    %s113 = smul.u32 4, %s112
    %s114 = ssub.s32 1, %s113
    %s115 = smul.u32 2, %s114
    %p116 = scmp.eq.s32.totalorder 0, 0
    // Predicated region
    $region14: #{tpu_custom_call.1} parent=1 // pred_check
      %p117 = pneg %p116
    $region15: #{tpu_custom_call.1} parent=1 // pred_check_branch
      %119 = sbr.rel (%p117) target = $region17
    $region16: #{tpu_custom_call.1} parent=1 // pred_region
      %120 = vst [vmem:[#allocation2] sm:$0xff] 0.0
    $region17: #{tpu_custom_call.1} parent=1 // pred_fallthru
      _
    %v121 = vld [vmem:[%s93] sm:$0xff]
    %v122 = vld [vmem:[%s109] sm:$0xff]
    %v123 = vsub.f32 %v121, %v122
    %v124 = vlaneseq
    %v125 = vand.u32 %v124, 127
    %v126 = vld [vmem:[%s82] sm:$0xff]
    %127 = vset.pattern.permute.xlu0 0
    %128 = vperm.xlu0 %127, %v126
    %v129 = vpop.permute.xlu0 %128
    %vm130 = vcmp.lt.s32.totalorder %v125, %v129
    %v131 = vsel %vm130, %v123, 0.0
    %v132 = vmul.f32 %v131, %v131
    %v133 = vld [vmem:[#allocation2] sm:$0xff]
    %v134 = vadd.f32 %v132, 0.0
    %v135 = vadd.f32 %v133, %v134
    %136 = vst [vmem:[#allocation2] sm:$0xff] %v135
    // Predicated region
    $region18: #{tpu_custom_call.1} parent=1 // pred_check
      %p137 = pneg %p116
    $region19: #{tpu_custom_call.1} parent=1 // pred_check_branch
      %139 = sbr.rel (%p137) target = $region21
    $region20: #{tpu_custom_call.1} parent=1 // pred_region
      %v140 = vld [vmem:[#allocation2] sm:$0xff]
      %141 = vadd.xlane.f32.xlu0 %v140
      %v142 = vpop.xlane.xlu0 %141
      %v143 = vrot.slane %v142, 4
      %v144 = vadd.f32 %v142, %v143
      %v145 = vrot.slane %v144, 2
      %v146 = vadd.f32 %v144, %v145
      %v147 = vrot.slane %v146, 1
      %v148 = vadd.f32 %v146, %v147
      %s149 = vtos %v148
      %v150 = vstv %s149
      %vm151 = vcmask 0
      %152 = vst.msk [vmem:[#allocation3] sm:$0x1] %vm151, %v150
    $region21: #{tpu_custom_call.1} parent=1 // pred_fallthru
      _
    // Predicated region
    $region22: #{tpu_custom_call.1} parent=1 // pred_check
      _
    $region23: #{tpu_custom_call.1} parent=1 // pred_check_branch
      %154 = sbr.rel (0) target = $region25
    $region24: #{tpu_custom_call.1} parent=1 // pred_region
      %156 = vsyncadd [#allocation4], 0
      %s158 = sshll.u32 [#allocation3], 4
      %s159 = int_to_ptr.vmem [resolvable:$true] %s158
      %s160 = sshll.u32 %s3, 4
      %s161 = int_to_ptr.hbm [resolvable:$true] %s160
      %163 = dma.vmem_to_hbm [thread:$0]  %s159, 16, %s161, [#allocation4]
    $region25: #{tpu_custom_call.1} parent=1 // pred_fallthru
      _
    // Predicated region
    $region26: #{tpu_custom_call.1} parent=1 // pred_check
      _
    $region27: #{tpu_custom_call.1} parent=1 // pred_check_branch
      %165 = sbr.rel (0) target = $region29
    $region28: #{tpu_custom_call.1} parent=1 // pred_region
      %167 = dma.done [#allocation4], 16
    $region29: #{tpu_custom_call.1} parent=1 // pred_fallthru
      _
    %168 = vsyncpa [#allocation4], 1

</llo_original>
